<compile_context>
chip_gen: v7x
topology: tpu7x:2x2x1
jax: 0.10.0
libtpu: 0.0.40
codegen_flags: <defaults>
</compile_context>

<pallas_src>
import math

import jax
import jax.numpy as jnp
from jax.experimental import pallas as pl
from jax.experimental.pallas import tpu as pltpu

N_FFT = 200
HOP = 100
N_FREQ = N_FFT // 2 + 1      # 101 (torch.stft onesided)
FREQ_PAD = 128               # freq axis padded to a full lane width
D_STATE = 128                # Mamba d_state (hardcoded in the module)
D_CONV = 4                   # Mamba d_conv


# --------------------- spectrogram + patch embedding (fused) ---------------------

def _spec_patch_kernel(f_ref, dft_ref, wp_ref, bp_ref, o_ref):
    # frames (tm, N_FFT) -> one 256-wide DFT matmul -> |.| -> bf16 Linear -> (tm, E)
    fr = f_ref[...]
    ri = jnp.dot(fr, dft_ref[...], preferred_element_type=jnp.float32)   # (tm, 2*FREQ_PAD)
    re = ri[:, :FREQ_PAD]
    im = ri[:, FREQ_PAD:]
    mag = jnp.sqrt(re * re + im * im)
    o_ref[...] = (jnp.dot(mag.astype(jnp.bfloat16), wp_ref[...],
                          preferred_element_type=jnp.float32) + bp_ref[...])


def pallas_spec_patch_embed(frames, dft_cat, wp, bp):
    M = frames.shape[0]
    E = wp.shape[1]
    # 512-row tiles (ragged tail handled by Pallas boundary masking); a single full-M block
    # only when M is small, so the kernel stays pipelined and VMEM-bounded at any M.
    tm = 512 if M >= 512 else M
    return pl.pallas_call(
        _spec_patch_kernel,
        out_shape=jax.ShapeDtypeStruct((M, E), jnp.float32),
        grid=(pl.cdiv(M, tm),),
        in_specs=[
            pl.BlockSpec((tm, N_FFT), lambda i: (i, 0)),
            pl.BlockSpec((N_FFT, 2 * FREQ_PAD), lambda i: (0, 0)),
            pl.BlockSpec((FREQ_PAD, E), lambda i: (0, 0)),
            pl.BlockSpec((1, E), lambda i: (0, 0)),
        ],
        out_specs=pl.BlockSpec((tm, E), lambda i: (i, 0)),
        compiler_params=pltpu.CompilerParams(dimension_semantics=("parallel",)),
    )(frames, dft_cat, wp, bp)


# --------------------------- fused Mamba block kernel ---------------------------

def _chunk_size(d):
    for c in (128, 64, 32, 16, 8):
        if d % c == 0:
            return c
    return d


def _mamba_block_kernel(x_ref, winx_ref, winz_ref, convw_ref, convb_ref,
                        wdt_ref, wB_ref, wC_ref, dtb_ref, A_ref, D_ref, wout_ref,
                        out_ref,
                        dt_sc, du_sc, B_sc, C_sc, gate_sc, y_sc):
    L = y_sc.shape[0]
    d_inner = y_sc.shape[1]

    # ---- in_proj (bf16 MXU, f32 accumulate); x / z halves kept lane-dense ----
    xe = x_ref[0].astype(jnp.bfloat16)                                        # (L, E)
    xi = jnp.dot(xe, winx_ref[...], preferred_element_type=jnp.float32)       # (L, d_inner)
    z = jnp.dot(xe, winz_ref[...], preferred_element_type=jnp.float32)
    gate_sc[...] = z * (1.0 / (1.0 + jnp.exp(-z)))                            # SiLU(z) gate

    # ---- causal depthwise conv (k=4, PyTorch cross-correlation tap order) + SiLU ----
    # TODO(synk): taps 1..3 are sublane-misaligned slices; pltpu.roll on the idle XLU slot
    # would remove the relayout copies (minor vs. the scan cost).
    xpad = jnp.concatenate(
        [jnp.zeros((D_CONV - 1, d_inner), jnp.float32), xi], axis=0)          # (L+3, d_inner)
    acc = convb_ref[...] + xpad[0:L, :] * convw_ref[0:1, :]
    for k in range(1, D_CONV):
        acc = acc + xpad[k:k + L, :] * convw_ref[k:k + 1, :]
    u = acc * (1.0 / (1.0 + jnp.exp(-acc)))                                   # scan input

    # ---- x_proj (dt_proj pre-fused) in bf16 with f32 accumulation ----
    ub = u.astype(jnp.bfloat16)
    dt_raw = jnp.dot(ub, wdt_ref[...], preferred_element_type=jnp.float32) + dtb_ref[...]
    dt = jnp.maximum(dt_raw, 0.0) + jnp.log(1.0 + jnp.exp(-jnp.abs(dt_raw)))  # softplus
    dt_sc[...] = dt
    du_sc[...] = dt * u
    B_sc[...] = jnp.dot(ub, wB_ref[...], preferred_element_type=jnp.float32)  # (L, d_state)
    C_sc[...] = jnp.dot(ub, wC_ref[...], preferred_element_type=jnp.float32)  # (L, d_state)
    y_sc[...] = D_ref[...] * u          # D-skip pre-loaded; the scan accumulates into it

    # ---- selective scan: d_inner chunked to <=128 lanes, h carried in registers ----
    CH = _chunk_size(d_inner)
    npair = L // 2
    for c in range(d_inner // CH):
        cs = c * CH

        def one_step(t, h, cs=cs):
            dt_t = dt_sc[pl.ds(t, 1), pl.ds(cs, CH)]                          # (1, CH)
            du_t = du_sc[pl.ds(t, 1), pl.ds(cs, CH)]
            B_t = B_sc[pl.ds(t, 1), :]                                        # (1, d_state)
            C_t = C_sc[pl.ds(t, 1), :]
            dA = jnp.exp(A_ref[:, pl.ds(cs, CH)] * dt_t)                      # EUP exp
            # TODO(synk): replace this K=1 MXU outer product with a transposed-B VPU
            # broadcast multiply once dynamic lane-width-1 slices are exercised/verified.
            dBu = jax.lax.dot_general(B_t, du_t, (((0,), (0,)), ((), ())),
                                      preferred_element_type=jnp.float32)     # (d_state, CH)
            h = dA * h + dBu
            y_sc[pl.ds(t, 1), pl.ds(cs, CH)] = (
                y_sc[pl.ds(t, 1), pl.ds(cs, CH)]
                + jnp.dot(C_t, h, preferred_element_type=jnp.float32))
            return h

        def pair_step(i, h, one_step=one_step):
            # manual unroll-by-2: step 2i+1's loads / exp / outer product overlap step 2i's FMA
            h = one_step(2 * i, h)
            return one_step(2 * i + 1, h)

        h = jax.lax.fori_loop(0, npair, pair_step,
                              jnp.zeros((D_STATE, CH), jnp.float32))
        if L % 2 == 1:
            one_step(L - 1, h)

    # ---- gate + out_proj (bf16 MXU), single dense store ----
    y = y_sc[...] * gate_sc[...]
    out_ref[0] = jnp.dot(y.astype(jnp.bfloat16), wout_ref[...],
                         preferred_element_type=jnp.float32)


def pallas_mamba_block(x, p):
    Bb, L, E = x.shape
    d_inner = p["D"].shape[1]
    # TODO(synk): for very long L on v7x (64 MiB VMEM) the pre/post-scan matmul stages should
    # additionally be chunked over L; named scratch here is 4*(L,d_inner)+2*(L,128) f32.
    return pl.pallas_call(
        _mamba_block_kernel,
        out_shape=jax.ShapeDtypeStruct((Bb, L, E), jnp.float32),
        grid=(Bb,),
        in_specs=[
            pl.BlockSpec((1, L, E), lambda b: (b, 0, 0)),          # x
            pl.BlockSpec((E, d_inner), lambda b: (0, 0)),          # in_proj x half (bf16)
            pl.BlockSpec((E, d_inner), lambda b: (0, 0)),          # in_proj z half (bf16)
            pl.BlockSpec((D_CONV, d_inner), lambda b: (0, 0)),     # conv weight
            pl.BlockSpec((1, d_inner), lambda b: (0, 0)),          # conv bias
            pl.BlockSpec((d_inner, d_inner), lambda b: (0, 0)),    # x_proj@dt_proj (bf16)
            pl.BlockSpec((d_inner, D_STATE), lambda b: (0, 0)),    # x_proj -> B (bf16)
            pl.BlockSpec((d_inner, D_STATE), lambda b: (0, 0)),    # x_proj -> C (bf16)
            pl.BlockSpec((1, d_inner), lambda b: (0, 0)),          # dt bias
            pl.BlockSpec((D_STATE, d_inner), lambda b: (0, 0)),    # A (general, learnable)
            pl.BlockSpec((1, d_inner), lambda b: (0, 0)),          # D skip
            pl.BlockSpec((d_inner, E), lambda b: (0, 0)),          # out_proj (bf16)
        ],
        out_specs=pl.BlockSpec((1, L, E), lambda b: (b, 0, 0)),
        scratch_shapes=[
            pltpu.VMEM((L, d_inner), jnp.float32),   # softplus(dt)
            pltpu.VMEM((L, d_inner), jnp.float32),   # dt * u
            pltpu.VMEM((L, D_STATE), jnp.float32),   # B
            pltpu.VMEM((L, D_STATE), jnp.float32),   # C
            pltpu.VMEM((L, d_inner), jnp.float32),   # SiLU(z) gate
            pltpu.VMEM((L, d_inner), jnp.float32),   # y (= D*u skip + scan output)
        ],
        compiler_params=pltpu.CompilerParams(
            dimension_semantics=("parallel",),
            vmem_limit_bytes=64 * 1024 * 1024),
        # TODO(synk): when Bb == 1 on v7x, add a second parallel grid axis over d_inner halves
        # so both TensorCores are busy.
    )(x, p["win_x"], p["win_z"], p["conv_w"], p["conv_b"],
      p["wdt"], p["wB"], p["wC"], p["dt_bias"], p["A"], p["D"], p["wout"])


# ------------------------------ classification head ------------------------------

def _make_head_kernel(L_total, tl):
    inv_L = 1.0 / float(L_total)

    def kernel(x_ref, wt_ref, b_ref, o_ref, acc_ref):
        li = pl.program_id(1)

        @pl.when(li == 0)
        def _():
            acc_ref[...] = jnp.zeros_like(acc_ref)

        rows = jax.lax.broadcasted_iota(jnp.int32, (tl, 1), 0) + li * tl
        valid = (rows < L_total).astype(jnp.float32)                # mask ragged last L-tile
        acc_ref[...] += jnp.sum(x_ref[0] * valid, axis=0, keepdims=True)

        @pl.when(li == pl.num_programs(1) - 1)
        def _():
            m = acc_ref[...] * inv_L                                # mean over seq
            e = jnp.where(m > 0.0, m, jnp.exp(jnp.minimum(m, 0.0)) - 1.0)   # ELU(alpha=1)
            o_ref[0] = (jnp.dot(e, wt_ref[...], preferred_element_type=jnp.float32)
                        + b_ref[...])

    return kernel


def pallas_mean_elu_linear(x, w_t, b):
    Bb, L, E = x.shape
    N = w_t.shape[1]
    tl = L if L <= 512 else 512
    out = pl.pallas_call(
        _make_head_kernel(L, tl),
        out_shape=jax.ShapeDtypeStruct((Bb, 1, N), jnp.float32),
        grid=(Bb, pl.cdiv(L, tl)),
        in_specs=[
            pl.BlockSpec((1, tl, E), lambda bi, li: (bi, li, 0)),
            pl.BlockSpec((E, N), lambda bi, li: (0, 0)),
            pl.BlockSpec((1, N), lambda bi, li: (0, 0)),
        ],
        out_specs=pl.BlockSpec((1, 1, N), lambda bi, li: (bi, 0, 0)),
        scratch_shapes=[pltpu.VMEM((1, E), jnp.float32)],
        compiler_params=pltpu.CompilerParams(
            dimension_semantics=("parallel", "arbitrary")),
    )(x, w_t, b)
    return out.reshape(Bb, N)


# ----------------------------------- JAX glue -----------------------------------

def frame_signal(x):
    """(B, C, TS) -> (B, C, n_frames, N_FFT) frames of torch.stft(center=False, hop=100)."""
    Bb, C, TS = x.shape
    assert N_FFT == 2 * HOP and TS >= N_FFT
    n_frames = 1 + (TS - N_FFT) // HOP
    usable = HOP * (n_frames + 1)
    halves = x[:, :, :usable].reshape(Bb, C, n_frames + 1, HOP)
    # frame t = [half_t | half_{t+1}]  (50% overlap)
    return jnp.concatenate([halves[:, :, :-1, :], halves[:, :, 1:, :]], axis=-1)


def supervised_pretrain_forward(x, params, task="chb-mit"):
    Bb, C, _ = x.shape
    E = params["patch_b"].shape[1]

    frames = frame_signal(x)                              # (B, C, F, 200)
    F = frames.shape[2]
    emb = pallas_spec_patch_embed(frames.reshape(Bb * C * F, N_FFT),
                                  params["dft_cat"], params["patch_Wt"], params["patch_b"])
    emb = emb.reshape(Bb, C * F, E)                       # channel-major seq, like torch.cat

    for p in params["mamba"]:                             # mamba1..mamba4 (dropout = identity)
        emb = pallas_mamba_block(emb, p)

    head = params["heads"][task]
    return pallas_mean_elu_linear(emb, head["Wt"], head["b"])


def init_params(key, emb_size=32):
    E = emb_size
    d_inner = 2 * E                       # expand = 2
    dt_rank = math.ceil(E / 16)

    def dense(k, fan_in, shape):
        return jax.random.normal(k, shape, jnp.float32) / jnp.sqrt(float(fan_in))

    keys = iter(jax.random.split(key, 80))
    params = {}

    # Rectangular-window onesided DFT as a single matmul weight: [cos | -sin], freq axis
    # zero-padded to 128 lanes each -> one 256-wide MXU pass in the spec kernel.
    n = jnp.arange(N_FFT, dtype=jnp.float32)[:, None]
    kk = jnp.arange(FREQ_PAD, dtype=jnp.float32)[None, :]
    ang = (2.0 * jnp.pi / N_FFT) * n * kk
    valid = (kk < N_FREQ).astype(jnp.float32)
    dft_r = jnp.cos(ang) * valid
    dft_i = -jnp.sin(ang) * valid
    params["dft_cat"] = jnp.concatenate([dft_r, dft_i], axis=1)      # (200, 256) f32

    wp = dense(next(keys), N_FREQ, (N_FREQ, E))                      # Linear(101, E)
    params["patch_Wt"] = jnp.pad(wp, ((0, FREQ_PAD - N_FREQ), (0, 0))).astype(jnp.bfloat16)
    params["patch_b"] = dense(next(keys), N_FREQ, (1, E))

    blocks = []
    for _ in range(4):
        p = {}
        win = dense(next(keys), E, (E, 2 * d_inner))                 # in_proj (no bias)
        p["win_x"] = win[:, :d_inner].astype(jnp.bfloat16)
        p["win_z"] = win[:, d_inner:].astype(jnp.bfloat16)
        p["conv_w"] = dense(next(keys), D_CONV, (D_CONV, d_inner))   # depthwise conv1d
        p["conv_b"] = dense(next(keys), D_CONV, (1, d_inner))
        wx = dense(next(keys), d_inner, (d_inner, dt_rank + 2 * D_STATE))   # x_proj (no bias)
        wdtp = dense(next(keys), dt_rank, (dt_rank, d_inner))               # dt_proj weight
        p["wdt"] = (wx[:, :dt_rank] @ wdtp).astype(jnp.bfloat16)     # dt_proj fused into x_proj
        p["wB"] = wx[:, dt_rank:dt_rank + D_STATE].astype(jnp.bfloat16)
        p["wC"] = wx[:, dt_rank + D_STATE:].astype(jnp.bfloat16)
        dt_init = 0.001 + 0.099 * jax.random.uniform(next(keys), (1, d_inner), jnp.float32)
        p["dt_bias"] = jnp.log(jnp.expm1(dt_init))                   # inverse softplus
        # General (loadable) A stored as (d_state, d_inner); Mamba init: A = -arange(1, 129).
        p["A"] = -jnp.broadcast_to(
            jnp.arange(1, D_STATE + 1, dtype=jnp.float32)[:, None], (D_STATE, d_inner))
        p["D"] = jnp.ones((1, d_inner), jnp.float32)
        p["wout"] = dense(next(keys), d_inner, (d_inner, E)).astype(jnp.bfloat16)  # out_proj
        blocks.append(p)
    params["mamba"] = blocks

    heads = {}
    for name, n_cls in (("chb-mit", 1), ("crowd_source", 1), ("tuab", 1), ("tuev", 6)):
        heads[name] = {"Wt": dense(next(keys), E, (E, n_cls)),
                       "b": jnp.zeros((1, n_cls), jnp.float32)}
    params["heads"] = heads
    return params


if __name__ == "__main__":
    root = jax.random.PRNGKey(0)
    pkey, xkey = jax.random.split(root)

    B, C, TS = 2, 4, 600        # 5 STFT frames per channel -> seq len L = 4*5 = 20
    EMB = 32                    # small emb_size for the test (module default is 256)

    params = init_params(pkey, emb_size=EMB)
    x = jax.random.normal(xkey, (B, C, TS), jnp.float32)

    out = supervised_pretrain_forward(x, params, task="chb-mit")
    out = jax.block_until_ready(out)
    assert out.shape == (B, 1) and out.dtype == jnp.float32
    # TODO(synk): train-time nn.Dropout masking and the (unused-in-forward) PositionalEncoding
    # are intentionally not implemented.
    print("KERNEL_OK")
</pallas_src>

<mosaic_0001>
module attributes {stable_mosaic.version = 11 : i64} {
  func.func @_spec_patch_kernel(%arg0: i32, %arg1: memref<40x200xf32, #tpu.memory_space<vmem>>, %arg2: memref<200x256xf32, #tpu.memory_space<vmem>>, %arg3: memref<128x32xbf16, #tpu.memory_space<vmem>>, %arg4: memref<1x32xf32, #tpu.memory_space<vmem>>, %arg5: memref<40x32xf32, #tpu.memory_space<vmem>>) attributes {dimension_semantics = [#tpu.dimension_semantics<parallel>], iteration_bounds = array<i64: 1>, scalar_prefetch = 0 : i64, scratch_operands = 0 : i64, tpu.core_type = #tpu.core_type<tc>, window_params = [{transform_indices = @transform_0, window_bounds = array<i64: 40, 200>}, {pipeline_mode = #tpu.pipeline_mode<synchronous>, transform_indices = @transform_1, window_bounds = array<i64: 200, 256>}, {pipeline_mode = #tpu.pipeline_mode<synchronous>, transform_indices = @transform_2, window_bounds = array<i64: 128, 32>}, {pipeline_mode = #tpu.pipeline_mode<synchronous>, transform_indices = @transform_3, window_bounds = array<i64: 1, 32>}, {transform_indices = @transform_4, window_bounds = array<i64: 40, 32>}]} {
    %c0 = arith.constant 0 : index
    %c0_0 = arith.constant 0 : index
    %0 = vector.load %arg1[%c0, %c0_0] : memref<40x200xf32, #tpu.memory_space<vmem>>, vector<40x200xf32>
    %c0_1 = arith.constant 0 : index
    %c0_2 = arith.constant 0 : index
    %1 = vector.load %arg2[%c0_1, %c0_2] : memref<200x256xf32, #tpu.memory_space<vmem>>, vector<200x256xf32>
    %cst = arith.constant dense<0.000000e+00> : vector<40x256xf32>
    %2 = tpu.matmul %0, %1, %cst {dimension_numbers = #tpu.dot_dimension_numbers<[1], [0], [0], [1], [0, 0, 1, 1], [], []>} : vector<40x200xf32>, vector<200x256xf32>, vector<40x256xf32> -> vector<40x256xf32>
    %3 = vector.extract_strided_slice %2 {offsets = [0, 0], sizes = [40, 128], strides = [1, 1]} : vector<40x256xf32> to vector<40x128xf32>
    %4 = vector.extract_strided_slice %2 {offsets = [0, 128], sizes = [40, 128], strides = [1, 1]} : vector<40x256xf32> to vector<40x128xf32>
    %5 = arith.mulf %3, %3 : vector<40x128xf32>
    %6 = arith.mulf %4, %4 : vector<40x128xf32>
    %7 = arith.addf %5, %6 : vector<40x128xf32>
    %8 = math.sqrt %7 : vector<40x128xf32>
    %9 = arith.truncf %8 : vector<40x128xf32> to vector<40x128xbf16>
    %c0_3 = arith.constant 0 : index
    %c0_4 = arith.constant 0 : index
    %10 = vector.load %arg3[%c0_3, %c0_4] : memref<128x32xbf16, #tpu.memory_space<vmem>>, vector<128x32xbf16>
    %cst_5 = arith.constant dense<0.000000e+00> : vector<40x32xf32>
    %11 = tpu.matmul %9, %10, %cst_5 {dimension_numbers = #tpu.dot_dimension_numbers<[1], [0], [0], [1], [0, 0, 1, 1], [], []>} : vector<40x128xbf16>, vector<128x32xbf16>, vector<40x32xf32> -> vector<40x32xf32>
    %c0_6 = arith.constant 0 : index
    %c0_7 = arith.constant 0 : index
    %12 = vector.load %arg4[%c0_6, %c0_7] : memref<1x32xf32, #tpu.memory_space<vmem>>, vector<1x32xf32>
    %13 = vector.broadcast %12 : vector<1x32xf32> to vector<40x32xf32>
    %14 = arith.addf %11, %13 : vector<40x32xf32>
    %c0_8 = arith.constant 0 : index
    %c0_9 = arith.constant 0 : index
    %15 = vector.load %arg5[%c0_8, %c0_9] : memref<40x32xf32, #tpu.memory_space<vmem>>, vector<40x32xf32>
    tpu.vector_store %arg5[%c0_8, %c0_9], %14 {strides = array<i32>} : memref<40x32xf32, #tpu.memory_space<vmem>>, vector<40x32xf32>,
    return
  }
  func.func @transform_0(%arg0: i32) -> (i32, i32) {
    %c0_i32 = arith.constant 0 : i32
    %c0_i32_0 = arith.constant 0 : i32
    return %arg0, %c0_i32 : i32, i32
  }
  func.func @transform_1(%arg0: i32) -> (i32, i32) {
    %c0_i32 = arith.constant 0 : i32
    %c0_i32_0 = arith.constant 0 : i32
    %c0_i32_1 = arith.constant 0 : i32
    return %c0_i32, %c0_i32_0 : i32, i32
  }
  func.func @transform_2(%arg0: i32) -> (i32, i32) {
    %c0_i32 = arith.constant 0 : i32
    %c0_i32_0 = arith.constant 0 : i32
    %c0_i32_1 = arith.constant 0 : i32
    return %c0_i32, %c0_i32_0 : i32, i32
  }
  func.func @transform_3(%arg0: i32) -> (i32, i32) {
    %c0_i32 = arith.constant 0 : i32
    %c0_i32_0 = arith.constant 0 : i32
    %c0_i32_1 = arith.constant 0 : i32
    return %c0_i32, %c0_i32_0 : i32, i32
  }
  func.func @transform_4(%arg0: i32) -> (i32, i32) {
    %c0_i32 = arith.constant 0 : i32
    %c0_i32_0 = arith.constant 0 : i32
    return %arg0, %c0_i32 : i32, i32
  }
}

</mosaic_0001>

<llo_original>
// kernel: tpu_custom_call.1
$region0: #{tpu_custom_call.1}
  #allocation0 [shape = 'u32[]', space=smem, size = 0x4, offset = 0x4, fixed_abs, tag = 'smem constant byte address 0x4 - core index']
  #allocation1 [shape = 'u32[144,128]{1,0:T(1,128)}', space=vmem, size = 0x12000, scoped, tag = 'internal scratch']
  %s0 = inlined_call_operand.vmem [shape: f32[40,200], index: 0, kind: input, shape index: {}]
  %s1 = inlined_call_operand.hbm [shape: f32[200,256], index: 1, kind: input, shape index: {}]
  %s2 = inlined_call_operand.vmem [shape: bf16[128,32], index: 2, kind: input, shape index: {}]
  %s3 = inlined_call_operand.vmem [shape: f32[1,32], index: 3, kind: input, shape index: {}]
  %s4 = inlined_call_operand.vmem [shape: f32[40,32], index: 4, kind: output, shape index: {}]
  %s5 = sld [smem:[#allocation0]]
  $region30: #{tpu_custom_call.1} parent=0
    _
  %s7 = ssub.s32 1, %s5
  %s8 = scalar_select 0, %s7, %s5
  $region1: #{tpu_custom_call.1} parent=0
    #allocation2 [shape = 'u8[204800]{0}', space=vmem, size = 0x32000, scoped, tag = 'input window, operand 1, single buffered']
    #allocation3 [shape = 's32[1]{0}', space=sflag, size = 0x4, scoped, tag = 'scoped memory for tpu_custom_call.1']
    %9 = vsyncpa [#allocation3], 0
    // Predicated region
    $region2: #{tpu_custom_call.1} parent=1 // pred_check
      _
    $region3: #{tpu_custom_call.1} parent=1 // pred_check_branch
      %11 = sbr.rel (0) target = $region5
    $region4: #{tpu_custom_call.1} parent=1 // pred_region
      _
    $region5: #{tpu_custom_call.1} parent=1 // pred_fallthru
      _
    // Predicated region
    $region6: #{tpu_custom_call.1} parent=1 // pred_check
      _
    $region7: #{tpu_custom_call.1} parent=1 // pred_check_branch
      %13 = sbr.rel (0) target = $region9
    $region8: #{tpu_custom_call.1} parent=1 // pred_region
      %s15 = ssub.s32 6400, 6400
      %16 = vsyncadd [#allocation3], %s15
      %s17 = sshll.u32 [#allocation2], 4
      %s18 = int_to_ptr.vmem [resolvable:$true] %s17
      %23 = dma.hbm_to_vmem [thread:$0]  %s1, 6400, %s18, [#allocation3], 256, 256, 16
    $region9: #{tpu_custom_call.1} parent=1 // pred_fallthru
      _
    // Predicated region
    $region10: #{tpu_custom_call.1} parent=1 // pred_check
      _
    $region11: #{tpu_custom_call.1} parent=1 // pred_check_branch
      %25 = sbr.rel (0) target = $region13
    $region12: #{tpu_custom_call.1} parent=1 // pred_region
      _
    $region13: #{tpu_custom_call.1} parent=1 // pred_fallthru
      _
    // Predicated region
    $region14: #{tpu_custom_call.1} parent=1 // pred_check
      _
    $region15: #{tpu_custom_call.1} parent=1 // pred_check_branch
      %27 = sbr.rel (0) target = $region17
    $region16: #{tpu_custom_call.1} parent=1 // pred_region
      _
    $region17: #{tpu_custom_call.1} parent=1 // pred_fallthru
      _
    // Predicated region
    $region18: #{tpu_custom_call.1} parent=1 // pred_check
      _
    $region19: #{tpu_custom_call.1} parent=1 // pred_check_branch
      %29 = sbr.rel (0) target = $region21
    $region20: #{tpu_custom_call.1} parent=1 // pred_region
      %30 = dma.done [#allocation3], 6400
    $region21: #{tpu_custom_call.1} parent=1 // pred_fallthru
      _
    %v32 = vld [vmem:[%s0] sm:$0xff]
    %v33 = vld [vmem:[%s0 + $0x8] sm:$0xff]
    %v34 = vld [vmem:[%s0 + $0x10] sm:$0xff]
    %v35 = vld [vmem:[%s0 + $0x18] sm:$0xff]
    %v36 = vld [vmem:[%s0 + $0x20] sm:$0xff]
    %v37 = vld [vmem:[%s0 + $0x28] sm:$0xff]
    %v38 = vld [vmem:[%s0 + $0x30] sm:$0xff]
    %v39 = vld [vmem:[%s0 + $0x38] sm:$0xff]
    %v40 = vld [vmem:[%s0 + $0x40] sm:$0xff]
    %v41 = vld [vmem:[%s0 + $0x48] sm:$0xff]
    %v42 = vld [vmem:[#allocation2] sm:$0xff]
    %v43 = vld [vmem:[#allocation2 + $0x8] sm:$0xff]
    %v44 = vld [vmem:[#allocation2 + $0x10] sm:$0xff]
    %v45 = vld [vmem:[#allocation2 + $0x18] sm:$0xff]
    %v46 = vld [vmem:[#allocation2 + $0x20] sm:$0xff]
    %v47 = vld [vmem:[#allocation2 + $0x28] sm:$0xff]
    %v48 = vld [vmem:[#allocation2 + $0x30] sm:$0xff]
    %v49 = vld [vmem:[#allocation2 + $0x38] sm:$0xff]
    %v50 = vld [vmem:[#allocation2 + $0x40] sm:$0xff]
    %v51 = vld [vmem:[#allocation2 + $0x48] sm:$0xff]
    %v52 = vld [vmem:[#allocation2 + $0x50] sm:$0xff]
    %v53 = vld [vmem:[#allocation2 + $0x58] sm:$0xff]
    %v54 = vld [vmem:[#allocation2 + $0x60] sm:$0xff]
    %v55 = vld [vmem:[#allocation2 + $0x68] sm:$0xff]
    %v56 = vld [vmem:[#allocation2 + $0x70] sm:$0xff]
    %v57 = vld [vmem:[#allocation2 + $0x78] sm:$0xff]
    %v58 = vld [vmem:[#allocation2 + $0x80] sm:$0xff]
    %v59 = vld [vmem:[#allocation2 + $0x88] sm:$0xff]
    %v60 = vld [vmem:[#allocation2 + $0x90] sm:$0xff]
    %v61 = vld [vmem:[#allocation2 + $0x98] sm:$0xff]
    %v62 = vld [vmem:[#allocation2 + $0xa0] sm:$0xff]
    %v63 = vld [vmem:[#allocation2 + $0xa8] sm:$0xff]
    %v64 = vld [vmem:[#allocation2 + $0xb0] sm:$0xff]
    %v65 = vld [vmem:[#allocation2 + $0xb8] sm:$0xff]
    %v66 = vld [vmem:[#allocation2 + $0xc0] sm:$0xff]
    %v67 = vld [vmem:[#allocation2 + $0xc8] sm:$0xff]
    %v68 = vld [vmem:[#allocation2 + $0xd0] sm:$0xff]
    %v69 = vld [vmem:[#allocation2 + $0xd8] sm:$0xff]
    %v70 = vld [vmem:[#allocation2 + $0xe0] sm:$0xff]
    %v71 = vld [vmem:[#allocation2 + $0xe8] sm:$0xff]
    %v72 = vld [vmem:[#allocation2 + $0xf0] sm:$0xff]
    %v73 = vld [vmem:[#allocation2 + $0xf8] sm:$0xff]
    %v74 = vld [vmem:[#allocation2 + $0x100] sm:$0xff]
    %v75 = vld [vmem:[#allocation2 + $0x108] sm:$0xff]
    %v76 = vld [vmem:[#allocation2 + $0x110] sm:$0xff]
    %v77 = vld [vmem:[#allocation2 + $0x118] sm:$0xff]
    %v78 = vld [vmem:[#allocation2 + $0x120] sm:$0xff]
    %v79 = vld [vmem:[#allocation2 + $0x128] sm:$0xff]
    %v80 = vld [vmem:[#allocation2 + $0x130] sm:$0xff]
    %v81 = vld [vmem:[#allocation2 + $0x138] sm:$0xff]
    %v82 = vld [vmem:[#allocation2 + $0x140] sm:$0xff]
    %v83 = vld [vmem:[#allocation2 + $0x148] sm:$0xff]
    %v84 = vld [vmem:[#allocation2 + $0x150] sm:$0xff]
    %v85 = vld [vmem:[#allocation2 + $0x158] sm:$0xff]
    %v86 = vld [vmem:[#allocation2 + $0x160] sm:$0xff]
    %v87 = vld [vmem:[#allocation2 + $0x168] sm:$0xff]
    %v88 = vld [vmem:[#allocation2 + $0x170] sm:$0xff]
    %v89 = vld [vmem:[#allocation2 + $0x178] sm:$0xff]
    %v90 = vld [vmem:[#allocation2 + $0x180] sm:$0xff]
    %v91 = vld [vmem:[#allocation2 + $0x188] sm:$0xff]
    %vm92 = vcmask 588800
    %v94 = vsel %vm92, %v33, 0
    %v97 = vsel %vm92, %v35, 0
    %v100 = vsel %vm92, %v37, 0
    %v103 = vsel %vm92, %v39, 0
    %v106 = vsel %vm92, %v41, 0
    %108 = vmatprep.subr.mxu0 %v43
    %109 = vmatpush1.msra.mxu0 %v42
    %110 = vmatprep.subr.mxu0 %v45
    %111 = vmatpush1.msra.mxu0 %v44
    %112 = vmatprep.subr.mxu0 %v47
    %113 = vmatpush1.msra.mxu0 %v46
    %114 = vmatprep.subr.mxu0 %v49
    %115 = vmatpush1.msra.mxu0 %v48
    %116 = vmatprep.subr.mxu0 %v51
    %117 = vmatpush1.msra.mxu0 %v50
    %118 = vmatprep.subr.mxu0 %v53
    %119 = vmatpush1.msra.mxu0 %v52
    %120 = vmatprep.subr.mxu0 %v55
    %121 = vmatpush1.msra.mxu0 %v54
    %122 = vmatprep.subr.mxu0 %v57
    %123 = vmatpush1.msra.mxu0 %v56
    %124 = vmatprep.subr.mxu0 %v59
    %125 = vmatpush1.msra.mxu0 %v58
    %126 = vmatprep.subr.mxu0 %v61
    %127 = vmatpush1.msra.mxu0 %v60
    %128 = vmatprep.subr.mxu0 %v63
    %129 = vmatpush1.msra.mxu0 %v62
    %130 = vmatprep.subr.mxu0 %v65
    %131 = vmatpush1.msra.mxu0 %v64
    %132 = vmatprep.subr.mxu0 %v67
    %133 = vmatpush1.msra.mxu0 %v66
    %134 = vmatprep.subr.mxu0 %v69
    %135 = vmatpush1.msra.mxu0 %v68
    %136 = vmatprep.subr.mxu0 %v71
    %137 = vmatpush1.msra.mxu0 %v70
    %138 = vmatprep.subr.mxu0 %v73
    %139 = vmatpush1.msra.mxu0 %v72
    %140 = vmatprep.subr.mxu0 %v75
    %141 = vmatpush1.msra.mxu0 %v74
    %142 = vmatprep.subr.mxu0 %v77
    %143 = vmatpush1.msra.mxu0 %v76
    %144 = vmatprep.subr.mxu0 %v79
    %145 = vmatpush1.msra.mxu0 %v78
    %146 = vmatprep.subr.mxu0 %v81
    %147 = vmatpush1.msra.mxu0 %v80
    %148 = vmatprep.subr.mxu0 %v83
    %149 = vmatpush1.msra.mxu0 %v82
    %150 = vmatprep.subr.mxu0 %v85
    %151 = vmatpush1.msra.mxu0 %v84
    %152 = vmatprep.subr.mxu0 %v87
    %153 = vmatpush1.msra.mxu0 %v86
    %154 = vmatprep.subr.mxu0 %v89
    %155 = vmatpush1.msra.mxu0 %v88
    %156 = vmatprep.subr.mxu0 %v91
    %157 = vmatpush1.msra.mxu0 %v90
    %158 = vmatprep.subr.mxu0 0.0
    %159 = vmatpush1.msra.mxu0 0.0
    %160 = vmatprep.subr.mxu0 0.0
    %161 = vmatpush1.msra.mxu0 0.0
    %162 = vmatprep.subr.mxu0 0.0
    %163 = vmatpush1.msra.mxu0 0.0
    %164 = vmatprep.subr.mxu0 0.0
    %165 = vmatpush1.msra.mxu0 0.0
    %166 = vmatprep.subr.mxu0 0.0
    %167 = vmatpush1.msra.mxu0 0.0
    %168 = vmatprep.subr.mxu0 0.0
    %169 = vmatpush1.msra.mxu0 0.0
    %170 = vmatprep.subr.mxu0 0.0
    %171 = vmatpush1.msra.mxu0 0.0
    %172 = vmatprep.mubr.f32.mxu0 %v94
    %173 = vmatmul.mubr.f32.gmra.mrb[0].mxu0 %v32
    %v174 = vpop.f32.mrb[0].mxu0
    %v175 = vadd.f32 0.0, %v174
    %v176 = vpop.f32.mrb[0].mxu0
    %v177 = vadd.f32 0.0, %v176
    %178 = vmatprep.mubr.f32.mxu0 %v97
    %179 = vmatmul.mubr.f32.gmra.mrb[0].mxu0 %v34
    %v180 = vpop.f32.mrb[0].mxu0
    %v181 = vadd.f32 0.0, %v180
    %v182 = vpop.f32.mrb[0].mxu0
    %v183 = vadd.f32 0.0, %v182
    %184 = vmatprep.mubr.f32.mxu0 %v100
    %185 = vmatmul.mubr.f32.gmra.mrb[0].mxu0 %v36
    %v186 = vpop.f32.mrb[0].mxu0
    %v187 = vadd.f32 0.0, %v186
    %v188 = vpop.f32.mrb[0].mxu0
    %v189 = vadd.f32 0.0, %v188
    %190 = vmatprep.mubr.f32.mxu0 %v103
    %191 = vmatmul.mubr.f32.gmra.mrb[0].mxu0 %v38
    %v192 = vpop.f32.mrb[0].mxu0
    %v193 = vadd.f32 0.0, %v192
    %v194 = vpop.f32.mrb[0].mxu0
    %v195 = vadd.f32 0.0, %v194
    %196 = vmatprep.mubr.f32.mxu0 %v106
    %197 = vmatmul.mubr.f32.gmra.mrb[0].mxu0 %v40
    %v198 = vpop.f32.mrb[0].mxu0
    %v199 = vadd.f32 0.0, %v198
    %v200 = vpop.f32.mrb[0].mxu0
    %v201 = vadd.f32 0.0, %v200
    %202 = vdwg.mxu0
    %v203 = vmul.f32 %v175, %v175
    %v204 = vmul.f32 %v181, %v181
    %v205 = vmul.f32 %v187, %v187
    %v206 = vmul.f32 %v193, %v193
    %v207 = vmul.f32 %v199, %v199
    %v208 = vmul.f32 %v177, %v177
    %v209 = vmul.f32 %v183, %v183
    %v210 = vmul.f32 %v189, %v189
    %v211 = vmul.f32 %v195, %v195
    %v212 = vmul.f32 %v201, %v201
    %v213 = vadd.f32 %v203, %v208
    %v214 = vadd.f32 %v204, %v209
    %v215 = vadd.f32 %v205, %v210
    %v216 = vadd.f32 %v206, %v211
    %v217 = vadd.f32 %v207, %v212
    %v218 = vrsqrt.pop %v213
    %v219 = vmul.f32 %v213, %v218
    %vm220 = vcmp.eq.f32.partialorder %v213, inf
    %v221 = vsel %vm220, %v213, %v219
    %vm222 = vcmp.eq.f32.partialorder %v213, 0.0
    %v223 = vand.u32 %v213, 2147483648
    %v224 = vsel %vm222, %v223, %v221
    %v225 = vrsqrt.pop %v214
    %v226 = vmul.f32 %v214, %v225
    %vm227 = vcmp.eq.f32.partialorder %v214, inf
    %v228 = vsel %vm227, %v214, %v226
    %vm229 = vcmp.eq.f32.partialorder %v214, 0.0
    %v230 = vand.u32 %v214, 2147483648
    %v231 = vsel %vm229, %v230, %v228
    %v232 = vrsqrt.pop %v215
    %v233 = vmul.f32 %v215, %v232
    %vm234 = vcmp.eq.f32.partialorder %v215, inf
    %v235 = vsel %vm234, %v215, %v233
    %vm236 = vcmp.eq.f32.partialorder %v215, 0.0
    %v237 = vand.u32 %v215, 2147483648
    %v238 = vsel %vm236, %v237, %v235
    %v239 = vrsqrt.pop %v216
    %v240 = vmul.f32 %v216, %v239
    %vm241 = vcmp.eq.f32.partialorder %v216, inf
    %v242 = vsel %vm241, %v216, %v240
    %vm243 = vcmp.eq.f32.partialorder %v216, 0.0
    %v244 = vand.u32 %v216, 2147483648
    %v245 = vsel %vm243, %v244, %v242
    %v246 = vrsqrt.pop %v217
    %v247 = vmul.f32 %v217, %v246
    %vm248 = vcmp.eq.f32.partialorder %v217, inf
    %v249 = vsel %vm248, %v217, %v247
    %vm250 = vcmp.eq.f32.partialorder %v217, 0.0
    %v251 = vand.u32 %v217, 2147483648
    %v252 = vsel %vm250, %v251, %v249
    %v253 = vpack.c.bf16 %v231, %v224
    %v254 = vpack.c.bf16 %v245, %v238
    %v255 = vpack.c.bf16 %v252, %v252
    %v256 = vld [vmem:[%s2] sm:$0xf]
    %v257 = vld [vmem:[%s2 + $0x4] sm:$0xf]
    %v258 = vld [vmem:[%s2 + $0x8] sm:$0xf]
    %v259 = vld [vmem:[%s2 + $0xc] sm:$0xf]
    %v260 = vld [vmem:[%s2 + $0x10] sm:$0xf]
    %v261 = vld [vmem:[%s2 + $0x14] sm:$0xf]
    %v262 = vld [vmem:[%s2 + $0x18] sm:$0xf]
    %v263 = vld [vmem:[%s2 + $0x1c] sm:$0xf]
    %v264 = vld [vmem:[%s2 + $0x20] sm:$0xf]
    %v265 = vld [vmem:[%s2 + $0x24] sm:$0xf]
    %v266 = vld [vmem:[%s2 + $0x28] sm:$0xf]
    %v267 = vld [vmem:[%s2 + $0x2c] sm:$0xf]
    %v268 = vld [vmem:[%s2 + $0x30] sm:$0xf]
    %v269 = vld [vmem:[%s2 + $0x34] sm:$0xf]
    %v270 = vld [vmem:[%s2 + $0x38] sm:$0xf]
    %v271 = vld [vmem:[%s2 + $0x3c] sm:$0xf]
    %v272 = vld [vmem:[%s3] sm:$0x1]
    %v274 = vlaneseq
    %v275 = vshrl.u32 %v274, 7
    %v276 = vsub.s32 0, %v275
    %v277 = vrot.slane %v272, %v276
    %v295 = vunpack.c.l.b16 %v256
    %v296 = vunpack.c.l.b16 %v257
    %v297 = vunpack.c.l.b16 %v258
    %v298 = vunpack.c.l.b16 %v259
    %v299 = vunpack.c.l.b16 %v260
    %v300 = vunpack.c.l.b16 %v261
    %v301 = vunpack.c.l.b16 %v262
    %v302 = vunpack.c.l.b16 %v263
    %v303 = vunpack.c.l.b16 %v264
    %v304 = vunpack.c.l.b16 %v265
    %v305 = vunpack.c.l.b16 %v266
    %v306 = vunpack.c.l.b16 %v267
    %v307 = vunpack.c.l.b16 %v268
    %v308 = vunpack.c.l.b16 %v269
    %v309 = vunpack.c.l.b16 %v270
    %v310 = vunpack.c.l.b16 %v271
    %v311 = vpack.c.b16 %v296, %v295
    %v312 = vpack.c.b16 %v298, %v297
    %v313 = vpack.c.b16 %v300, %v299
    %v314 = vpack.c.b16 %v302, %v301
    %v315 = vpack.c.b16 %v304, %v303
    %v316 = vpack.c.b16 %v306, %v305
    %v317 = vpack.c.b16 %v308, %v307
    %v318 = vpack.c.b16 %v310, %v309
    %327 = vmatprep.subr.bf16.mxu0 0
    %328 = vmatpush1.bf16.msra.mxu0 %v311
    %329 = vmatprep.subr.bf16.mxu0 0
    %330 = vmatpush1.bf16.msra.mxu0 %v312
    %331 = vmatprep.subr.bf16.mxu0 0
    %332 = vmatpush1.bf16.msra.mxu0 %v313
    %333 = vmatprep.subr.bf16.mxu0 0
    %334 = vmatpush1.bf16.msra.mxu0 %v314
    %335 = vmatprep.subr.bf16.mxu0 0
    %336 = vmatpush1.bf16.msra.mxu0 %v315
    %337 = vmatprep.subr.bf16.mxu0 0
    %338 = vmatpush1.bf16.msra.mxu0 %v316
    %339 = vmatprep.subr.bf16.mxu0 0
    %340 = vmatpush1.bf16.msra.mxu0 %v317
    %341 = vmatprep.subr.bf16.mxu0 0
    %342 = vmatpush1.bf16.msra.mxu0 %v318
    %343 = vmatprep.subr.bf16.mxu0 0
    %344 = vmatpush1.bf16.msra.mxu0 0
    %345 = vmatprep.subr.bf16.mxu0 0
    %346 = vmatpush1.bf16.msra.mxu0 0
    %347 = vmatprep.subr.bf16.mxu0 0
    %348 = vmatpush1.bf16.msra.mxu0 0
    %349 = vmatprep.subr.bf16.mxu0 0
    %350 = vmatpush1.bf16.msra.mxu0 0
    %351 = vmatprep.subr.bf16.mxu0 0
    %352 = vmatpush1.bf16.msra.mxu0 0
    %353 = vmatprep.subr.bf16.mxu0 0
    %354 = vmatpush1.bf16.msra.mxu0 0
    %355 = vmatprep.subr.bf16.mxu0 0
    %356 = vmatpush1.bf16.msra.mxu0 0
    %357 = vmatprep.subr.bf16.mxu0 0
    %358 = vmatpush1.bf16.msra.mxu0 0
    %359 = vmatprep.mubr.bf16.mxu0 0
    %360 = vmatmul.mubr.bf16.gmra.mrb[0].mxu0 %v253
    %v361 = vpop.f32.mrb[0].mxu0
    %v362 = vadd.f32 %v277, %v361
    %v363 = vpop.f32.mrb[0].mxu0
    %v364 = vpop.f32.mrb[0].mxu0
    %v365 = vadd.f32 %v277, %v364
    %v366 = vpop.f32.mrb[0].mxu0
    %367 = vmatprep.mubr.bf16.mxu0 0
    %368 = vmatmul.mubr.bf16.gmra.mrb[0].mxu0 %v254
    %v369 = vpop.f32.mrb[0].mxu0
    %v370 = vadd.f32 %v277, %v369
    %v371 = vpop.f32.mrb[0].mxu0
    %v372 = vpop.f32.mrb[0].mxu0
    %v373 = vadd.f32 %v277, %v372
    %v374 = vpop.f32.mrb[0].mxu0
    %375 = vmatprep.mubr.bf16.mxu0 0
    %376 = vmatmul.mubr.bf16.gmra.mrb[0].mxu0 %v255
    %v377 = vpop.f32.mrb[0].mxu0
    %v378 = vadd.f32 %v277, %v377
    %v379 = vpop.f32.mrb[0].mxu0
    %v380 = vpop.f32.mrb[0].mxu0
    %v381 = vpop.f32.mrb[0].mxu0
    %382 = vdwg.mxu0
    %vm383 = vcmask 261120
    %384 = vst.msk [vmem:[%s4] sm:$0xff] %vm383, %v362
    %385 = vst.msk [vmem:[%s4 + $0x8] sm:$0xff] %vm383, %v365
    %386 = vst.msk [vmem:[%s4 + $0x10] sm:$0xff] %vm383, %v370
    %387 = vst.msk [vmem:[%s4 + $0x18] sm:$0xff] %vm383, %v373
    %388 = vst.msk [vmem:[%s4 + $0x20] sm:$0xff] %vm383, %v378
    // Predicated region
    $region22: #{tpu_custom_call.1} parent=1 // pred_check
      _
    $region23: #{tpu_custom_call.1} parent=1 // pred_check_branch
      %390 = sbr.rel (0) target = $region25
    $region24: #{tpu_custom_call.1} parent=1 // pred_region
      _
    $region25: #{tpu_custom_call.1} parent=1 // pred_fallthru
      _
    // Predicated region
    $region26: #{tpu_custom_call.1} parent=1 // pred_check
      _
    $region27: #{tpu_custom_call.1} parent=1 // pred_check_branch
      %392 = sbr.rel (0) target = $region29
    $region28: #{tpu_custom_call.1} parent=1 // pred_region
      _
    $region29: #{tpu_custom_call.1} parent=1 // pred_fallthru
      _
    %393 = vsyncpa [#allocation3], 1

</llo_original>
